<compile_context>
chip_gen: v7x
topology: tpu7x:2x2x1
jax: 0.10.0
libtpu: 0.0.40
codegen_flags: <defaults>
</compile_context>

<pallas_src>
import jax
import jax.numpy as jnp
from jax import lax
from jax.experimental import pallas as pl
from jax.experimental.pallas import tpu as pltpu


# Conservative working-set budget: fits v7x's 64 MiB physical VMEM with headroom and is
# well under v5e/v6e's 128 MiB.
_VMEM_BUDGET_BYTES = 40 * 1024 * 1024
# Below this we leave the compiler's default scoped-VMEM limit alone
# (16 MiB on v5e, 32 MiB on v6e/v7x).
_DEFAULT_SCOPED_VMEM = 14 * 1024 * 1024


def _round_up(n, m):
    return (n + m - 1) // m * m


def _sublane_multiple(dtype):
    # Sub-32-bit dtypes pack along sublanes: min sublane tile 8 (4B), 16 (2B), 32 (1B).
    return {4: 8, 2: 16, 1: 32}.get(jnp.dtype(dtype).itemsize, 8)


def _sample_w(mu_ref, rho_ref, eps_ref):
    """Reparameterized weight sample in f32: mu + eps * softplus(rho)."""
    rho = rho_ref[...].astype(jnp.float32)
    # Numerically stable softplus: log(1+exp(rho)) = max(rho,0) + log(1+exp(-|rho|)).
    sigma = jnp.maximum(rho, 0.0) + jnp.log(1.0 + jnp.exp(-jnp.abs(rho)))
    return mu_ref[...].astype(jnp.float32) + eps_ref[...].astype(jnp.float32) * sigma


def _bayes_linear_cached_kernel(x_ref, mu_ref, rho_ref, eps_ref, o_ref, w_ref):
    """Full-K-resident path (nk == 1): sample w once per weight tile, reuse over batch tiles."""
    # Grid = (nj, ni); i (batch tiles) is the fast axis, so for a fixed out-tile j the
    # mu/rho/eps blocks stay VMEM-resident and the sampled weight only needs computing at
    # the first batch tile.  The batch axis is "arbitrary", so i == 0 runs on every core.
    @pl.when(pl.program_id(1) == 0)
    def _():
        # Cache is pre-cast to the MXU input dtype (bf16 when x is bf16): the EUP/VPU
        # reparam work + cast are paid once per weight tile, not once per batch tile.
        w_ref[...] = _sample_w(mu_ref, rho_ref, eps_ref).astype(w_ref.dtype)

    # x @ w.T without materializing w.T; direct store (no accumulator needed when nk == 1).
    o_ref[...] = lax.dot_general(
        x_ref[...],
        w_ref[...],
        dimension_numbers=(((1,), (1,)), ((), ())),
        preferred_element_type=jnp.float32,
    ).astype(o_ref.dtype)


def _bayes_linear_ktiled_kernel(x_ref, mu_ref, rho_ref, eps_ref, o_ref, acc_ref):
    """Fallback (K too large for full VMEM residency): k-tiled reduction, f32 accumulator."""
    k = pl.program_id(2)

    @pl.when(k == 0)
    def _():
        acc_ref[...] = jnp.zeros_like(acc_ref)

    xv = x_ref[...]                              # (tm, tk)
    w = _sample_w(mu_ref, rho_ref, eps_ref)      # (tn, tk), f32
    acc_ref[...] += lax.dot_general(
        xv,
        w.astype(xv.dtype),                      # bf16 inputs keep the bf16 MXU path
        dimension_numbers=(((1,), (1,)), ((), ())),
        preferred_element_type=jnp.float32,
    )

    @pl.when(k == pl.num_programs(2) - 1)
    def _():
        o_ref[...] = acc_ref[...].astype(o_ref.dtype)


def bayes_linear(x, weights_mu, weights_rho, eps, *, tm=None, tn=None, tk=None,
                 vmem_budget_bytes=_VMEM_BUDGET_BYTES):
    """y = x @ (weights_mu + eps * softplus(weights_rho)).T

    x:         (B, in_features)
    weights_*: (out_features, in_features)   (f32 or bf16; reparam math runs in f32)
    eps:       (out_features, in_features)
    returns:   (B, out_features) in x.dtype
    """
    B, K = x.shape
    O, K2 = weights_mu.shape
    assert K == K2 and weights_rho.shape == (O, K) and eps.shape == (O, K)

    x_bytes = jnp.dtype(x.dtype).itemsize
    w_bytes = jnp.dtype(weights_mu.dtype).itemsize
    out_dtype = x.dtype
    out_bytes = jnp.dtype(out_dtype).itemsize
    sub = _sublane_multiple(x.dtype)

    # MXU-input / weight-cache dtype: bf16 end-to-end when activations are bf16,
    # otherwise keep f32 semantics.
    w_cache_dtype = jnp.bfloat16 if x.dtype == jnp.bfloat16 else jnp.float32
    wc_bytes = jnp.dtype(w_cache_dtype).itemsize

    # Lane-dense out-feature tiles (>=128 -> unmasked vst on the output path).
    tn = min(256, _round_up(O, 128)) if tn is None else _round_up(tn, 128)

    K_p128 = _round_up(K, 128)

    tm_given = tm is not None
    if tm is None:
        # Large batch tiles amortize per-step pipeline overhead; dtype-aware rounding.
        tm = min(512, _round_up(B, sub))
    else:
        tm = _round_up(tm, sub)

    def _cached_bytes(tm_):
        return (2 * tm_ * K_p128 * x_bytes         # x block, double-buffered
                + 3 * 2 * tn * K_p128 * w_bytes    # mu/rho/eps blocks, double-buffered
                + 2 * tm_ * tn * out_bytes         # out block, double-buffered
                + tn * K_p128 * wc_bytes)          # persistent sampled-weight cache
    # TODO(synk): pipeline_mode=pl.Buffered(1) on mu/rho/eps would halve their VMEM
    # footprint (block index constant across batch tiles), extending full-K residency
    # on v7x's 64 MiB VMEM.

    if tk is not None:
        tk = _round_up(tk, 128)
        use_cached = tk >= K_p128
        if use_cached:
            tk = K_p128
    else:
        use_cached = False
        t = tm
        while True:
            if _cached_bytes(t) <= vmem_budget_bytes:
                use_cached, tm, tk = True, t, K_p128
                break
            if tm_given:
                break
            t_next = max(sub, (t // 2) // sub * sub)
            if t_next >= t:
                break
            t = t_next
        if not use_cached:
            # Largest k-tile (multiple of 128) whose streamed blocks fit the budget.
            per_k = 2 * tm * x_bytes + 6 * tn * w_bytes
            fixed = 2 * tm * tn * out_bytes + tm * tn * 4
            tk = (max(vmem_budget_bytes - fixed, 0) // per_k) // 128 * 128
            tk = int(min(max(tk, 128), K_p128, 4096))

    # Pad to tile multiples only when needed.  Zero padding is exact: padded eps/mu are
    # zero so the sampled padded weights are zero, padded x columns are zero, and padded
    # output rows/cols are sliced off below.
    B_p = _round_up(B, tm)
    O_p = _round_up(O, tn)
    K_p = K_p128 if use_cached else _round_up(K, tk)

    if (B_p, K_p) != (B, K):
        x = jnp.pad(x, ((0, B_p - B), (0, K_p - K)))
    if (O_p, K_p) != (O, K):
        pad_w = ((0, O_p - O), (0, K_p - K))
        weights_mu = jnp.pad(weights_mu, pad_w)
        weights_rho = jnp.pad(weights_rho, pad_w)
        eps = jnp.pad(eps, pad_w)

    nj, ni = O_p // tn, B_p // tm

    if use_cached:
        vmem_needed = _cached_bytes(tm)
        kernel = _bayes_linear_cached_kernel
        grid_spec = pltpu.PrefetchScalarGridSpec(
            num_scalar_prefetch=0,
            grid=(nj, ni),                                        # batch axis fastest
            in_specs=[
                pl.BlockSpec((tm, K_p), lambda j, i: (i, 0)),     # x: streams per batch tile
                pl.BlockSpec((tn, K_p), lambda j, i: (j, 0)),     # mu:  resident across i
                pl.BlockSpec((tn, K_p), lambda j, i: (j, 0)),     # rho: resident across i
                pl.BlockSpec((tn, K_p), lambda j, i: (j, 0)),     # eps: resident across i
            ],
            out_specs=pl.BlockSpec((tm, tn), lambda j, i: (i, j)),
            scratch_shapes=[pltpu.VMEM((tn, K_p), w_cache_dtype)],
        )
        # Out-feature axis "parallel": v7x's two TensorCores split the dominant weight
        # stream; batch axis "arbitrary" so the i == 0 cache fill runs on every core.
        dims = ("parallel", "arbitrary")
    else:
        nk = K_p // tk
        vmem_needed = (2 * tm * tk * x_bytes + 6 * tn * tk * w_bytes
                       + 2 * tm * tn * out_bytes + tm * tn * 4)
        kernel = _bayes_linear_ktiled_kernel
        grid_spec = pltpu.PrefetchScalarGridSpec(
            num_scalar_prefetch=0,
            grid=(nj, ni, nk),                                    # K reduction trailing
            in_specs=[
                pl.BlockSpec((tm, tk), lambda j, i, k: (i, k)),   # x
                pl.BlockSpec((tn, tk), lambda j, i, k: (j, k)),   # mu
                pl.BlockSpec((tn, tk), lambda j, i, k: (j, k)),   # rho
                pl.BlockSpec((tn, tk), lambda j, i, k: (j, k)),   # eps
            ],
            out_specs=pl.BlockSpec((tm, tn), lambda j, i, k: (i, j)),
            scratch_shapes=[pltpu.VMEM((tm, tn), jnp.float32)],
        )
        dims = ("parallel", "parallel", "arbitrary")

    cp = dict(dimension_semantics=dims)
    if vmem_needed > _DEFAULT_SCOPED_VMEM:
        # Leave headroom for compiler-internal scratch; stay under v7x's 64 MiB physical VMEM.
        cp["vmem_limit_bytes"] = int(min(vmem_needed + vmem_needed // 4 + (2 << 20),
                                         56 * 1024 * 1024))

    out = pl.pallas_call(
        kernel,
        out_shape=jax.ShapeDtypeStruct((B_p, O_p), out_dtype),
        grid_spec=grid_spec,
        compiler_params=pltpu.CompilerParams(**cp),
    )(x, weights_mu, weights_rho, eps)

    return out[:B, :O]


if __name__ == "__main__":
    def reference(x, mu, rho, eps):
        rho32 = rho.astype(jnp.float32)
        sigma = jnp.log(1.0 + jnp.exp(rho32))
        w = mu.astype(jnp.float32) + eps.astype(jnp.float32) * sigma
        return (x.astype(jnp.float32) @ w.T).astype(x.dtype)

    def make_inputs(key, B, K, O):
        k_x, k_mu, k_rho, k_eps = jax.random.split(key, 4)
        x = jax.random.normal(k_x, (B, K), dtype=jnp.float32)
        mu = 0.1 * jax.random.normal(k_mu, (O, K), dtype=jnp.float32)
        rho = -1.0 + 0.1 * jax.random.normal(k_rho, (O, K), dtype=jnp.float32)
        # eps ~ N(0,1): the stochastic part of the reparameterization, sampled fresh per
        # forward call in JAX glue (deterministic here via the fixed key).
        eps = jax.random.normal(k_eps, (O, K), dtype=jnp.float32)
        return x, mu, rho, eps

    key = jax.random.PRNGKey(0)
    k1, k2, k3 = jax.random.split(key, 3)

    # 1) Small, spec-consistent shapes -> cached (full-K-resident) path, single tile.
    x, mu, rho, eps = make_inputs(k1, 8, 32, 16)
    y = jax.block_until_ready(bayes_linear(x, mu, rho, eps))
    y_ref = reference(x, mu, rho, eps)
    assert y.shape == (8, 16)
    assert jnp.allclose(y, y_ref, atol=1e-5, rtol=1e-5), "small cached-path mismatch"

    # 2) Multi-tile cached path: the sampled-weight cache is reused across 3 batch tiles
    #    per out-tile (nj=3, ni=3, no padding needed).
    x, mu, rho, eps = make_inputs(k2, 384, 256, 384)
    y = jax.block_until_ready(bayes_linear(x, mu, rho, eps, tm=128, tn=128))
    y_ref = reference(x, mu, rho, eps)
    assert jnp.allclose(y, y_ref, atol=5e-3, rtol=5e-3), "multi-tile cached-path mismatch"

    # 3) k-tiled fallback path (forced tk < K -> nk=2 reduction with f32 accumulator).
    x, mu, rho, eps = make_inputs(k3, 64, 512, 128)
    y = jax.block_until_ready(bayes_linear(x, mu, rho, eps, tm=64, tn=128, tk=256))
    y_ref = reference(x, mu, rho, eps)
    assert jnp.allclose(y, y_ref, atol=5e-3, rtol=5e-3), "k-tiled fallback mismatch"

    print("KERNEL_OK")
</pallas_src>

<mosaic_0001>
module attributes {stable_mosaic.version = 11 : i64} {
  func.func @_bayes_linear_cached_kernel(%arg0: i32, %arg1: i32, %arg2: memref<8x128xf32, #tpu.memory_space<vmem>>, %arg3: memref<128x128xf32, #tpu.memory_space<vmem>>, %arg4: memref<128x128xf32, #tpu.memory_space<vmem>>, %arg5: memref<128x128xf32, #tpu.memory_space<vmem>>, %arg6: memref<8x128xf32, #tpu.memory_space<vmem>>, %arg7: memref<128x128xf32, #tpu.memory_space<vmem>>) attributes {dimension_semantics = [#tpu.dimension_semantics<parallel>, #tpu.dimension_semantics<arbitrary>], iteration_bounds = array<i64: 1, 1>, scalar_prefetch = 0 : i64, scratch_operands = 1 : i64, tpu.core_type = #tpu.core_type<tc>, window_params = [{transform_indices = @transform_0, window_bounds = array<i64: 8, 128>}, {transform_indices = @transform_1, window_bounds = array<i64: 128, 128>}, {transform_indices = @transform_2, window_bounds = array<i64: 128, 128>}, {transform_indices = @transform_3, window_bounds = array<i64: 128, 128>}, {transform_indices = @transform_4, window_bounds = array<i64: 8, 128>}]} {
    %c0_i32 = arith.constant 0 : i32
    %0 = arith.cmpi eq, %arg1, %c0_i32 : i32
    %1 = arith.extui %0 : i1 to i32
    %c0_i32_0 = arith.constant 0 : i32
    %2 = arith.cmpi ne, %1, %c0_i32_0 : i32
    scf.if %2 {
      %c0_6 = arith.constant 0 : index
      %c0_7 = arith.constant 0 : index
      %7 = vector.load %arg4[%c0_6, %c0_7] : memref<128x128xf32, #tpu.memory_space<vmem>>, vector<128x128xf32>
      %cst_8 = arith.constant 0.000000e+00 : f32
      %8 = vector.broadcast %cst_8 : f32 to vector<128x128xf32>
      %9 = arith.maximumf %7, %8 : vector<128x128xf32>
      %10 = math.absf %7 : vector<128x128xf32>
      %cst_9 = arith.constant 0.000000e+00 : f32
      %11 = vector.broadcast %cst_9 : f32 to vector<128x128xf32>
      %12 = arith.subf %11, %10 : vector<128x128xf32>
      %13 = math.exp %12 : vector<128x128xf32>
      %cst_10 = arith.constant 1.000000e+00 : f32
      %14 = vector.broadcast %cst_10 : f32 to vector<128x128xf32>
      %15 = arith.addf %14, %13 : vector<128x128xf32>
      %16 = math.log %15 : vector<128x128xf32>
      %17 = arith.addf %9, %16 : vector<128x128xf32>
      %c0_11 = arith.constant 0 : index
      %c0_12 = arith.constant 0 : index
      %18 = vector.load %arg3[%c0_11, %c0_12] : memref<128x128xf32, #tpu.memory_space<vmem>>, vector<128x128xf32>
      %c0_13 = arith.constant 0 : index
      %c0_14 = arith.constant 0 : index
      %19 = vector.load %arg5[%c0_13, %c0_14] : memref<128x128xf32, #tpu.memory_space<vmem>>, vector<128x128xf32>
      %20 = arith.mulf %19, %17 : vector<128x128xf32>
      %21 = arith.addf %18, %20 : vector<128x128xf32>
      %c0_15 = arith.constant 0 : index
      %c0_16 = arith.constant 0 : index
      %22 = vector.load %arg7[%c0_15, %c0_16] : memref<128x128xf32, #tpu.memory_space<vmem>>, vector<128x128xf32>
      tpu.vector_store %arg7[%c0_15, %c0_16], %21 {strides = array<i32>} : memref<128x128xf32, #tpu.memory_space<vmem>>, vector<128x128xf32>,
    } else {
    }
    %c0 = arith.constant 0 : index
    %c0_1 = arith.constant 0 : index
    %3 = vector.load %arg2[%c0, %c0_1] : memref<8x128xf32, #tpu.memory_space<vmem>>, vector<8x128xf32>
    %c0_2 = arith.constant 0 : index
    %c0_3 = arith.constant 0 : index
    %4 = vector.load %arg7[%c0_2, %c0_3] : memref<128x128xf32, #tpu.memory_space<vmem>>, vector<128x128xf32>
    %cst = arith.constant dense<0.000000e+00> : vector<8x128xf32>
    %5 = tpu.matmul %3, %4, %cst {dimension_numbers = #tpu.dot_dimension_numbers<[1], [1], [0], [0], [0, 0, 1, 0], [], []>} : vector<8x128xf32>, vector<128x128xf32>, vector<8x128xf32> -> vector<8x128xf32>
    %c0_4 = arith.constant 0 : index
    %c0_5 = arith.constant 0 : index
    %6 = vector.load %arg6[%c0_4, %c0_5] : memref<8x128xf32, #tpu.memory_space<vmem>>, vector<8x128xf32>
    tpu.vector_store %arg6[%c0_4, %c0_5], %5 {strides = array<i32>} : memref<8x128xf32, #tpu.memory_space<vmem>>, vector<8x128xf32>,
    return
  }
  func.func @transform_0(%arg0: i32, %arg1: i32) -> (i32, i32) {
    %c0_i32 = arith.constant 0 : i32
    %c0_i32_0 = arith.constant 0 : i32
    return %arg1, %c0_i32 : i32, i32
  }
  func.func @transform_1(%arg0: i32, %arg1: i32) -> (i32, i32) {
    %c0_i32 = arith.constant 0 : i32
    %c0_i32_0 = arith.constant 0 : i32
    return %arg0, %c0_i32 : i32, i32
  }
  func.func @transform_2(%arg0: i32, %arg1: i32) -> (i32, i32) {
    %c0_i32 = arith.constant 0 : i32
    %c0_i32_0 = arith.constant 0 : i32
    return %arg0, %c0_i32 : i32, i32
  }
  func.func @transform_3(%arg0: i32, %arg1: i32) -> (i32, i32) {
    %c0_i32 = arith.constant 0 : i32
    %c0_i32_0 = arith.constant 0 : i32
    return %arg0, %c0_i32 : i32, i32
  }
  func.func @transform_4(%arg0: i32, %arg1: i32) -> (i32, i32) {
    %c0_i32 = arith.constant 0 : i32
    return %arg1, %arg0 : i32, i32
  }
}

</mosaic_0001>

<llo_original>
// kernel: tpu_custom_call.1
$region0: #{tpu_custom_call.1}
  #allocation0 [shape = 'u32[]', space=smem, size = 0x4, offset = 0x4, fixed_abs, tag = 'smem constant byte address 0x4 - core index']
  #allocation1 [shape = 'u32[144,128]{1,0:T(1,128)}', space=vmem, size = 0x12000, scoped, tag = 'internal scratch']
  #allocation2 [shape = 'f32[128,128]{1,0:T(8,128)}', space=vmem, size = 0x10000, scoped, tag = 'scratch operand']
  %s0 = inlined_call_operand.hbm [shape: f32[8,128], index: 0, kind: input, shape index: {}]
  %s1 = inlined_call_operand.hbm [shape: f32[128,128], index: 1, kind: input, shape index: {}]
  %s2 = inlined_call_operand.hbm [shape: f32[128,128], index: 2, kind: input, shape index: {}]
  %s3 = inlined_call_operand.hbm [shape: f32[128,128], index: 3, kind: input, shape index: {}]
  %s4 = inlined_call_operand.hbm [shape: f32[8,128], index: 4, kind: output, shape index: {}]
  %s5 = sld [smem:[#allocation0]]
  $region46: #{tpu_custom_call.1} parent=0
    _
  %s7 = ssub.s32 1, %s5
  %s8 = scalar_select 0, %s7, %s5
  $region1: #{tpu_custom_call.1} parent=0
    #allocation3 [shape = 'u8[4096]{0}', space=vmem, size = 0x1000, scoped, tag = 'input window, operand 0, single buffered']
    #allocation4 [shape = 's32[1]{0}', space=sflag, size = 0x4, scoped, tag = 'scoped memory for tpu_custom_call.1']
    #allocation5 [shape = 's32[1]{0}', space=sflag, size = 0x4, scoped, tag = 'scoped memory for tpu_custom_call.1']
    #allocation6 [shape = 'u8[65536]{0}', space=vmem, size = 0x10000, scoped, tag = 'input window, operand 1, single buffered']
    #allocation7 [shape = 's32[1]{0}', space=sflag, size = 0x4, scoped, tag = 'scoped memory for tpu_custom_call.1']
    #allocation8 [shape = 'u8[65536]{0}', space=vmem, size = 0x10000, scoped, tag = 'input window, operand 2, single buffered']
    #allocation9 [shape = 'u8[65536]{0}', space=vmem, size = 0x10000, scoped, tag = 'input window, operand 3, single buffered']
    #allocation10 [shape = 's32[1]{0}', space=sflag, size = 0x4, scoped, tag = 'scoped memory for tpu_custom_call.1']
    #allocation11 [shape = 'u8[4096]{0}', space=vmem, size = 0x1000, scoped, tag = 'output window, operand 0, single buffered']
    %9 = vsyncpa [#allocation4], 0
    %10 = vsyncpa [#allocation7], 0
    %11 = vsyncpa [#allocation10], 0
    %12 = vsyncpa [#allocation5], 0
    // Predicated region
    $region2: #{tpu_custom_call.1} parent=1 // pred_check
      _
    $region3: #{tpu_custom_call.1} parent=1 // pred_check_branch
      %14 = sbr.rel (0) target = $region5
    $region4: #{tpu_custom_call.1} parent=1 // pred_region
      %s16 = ssub.s32 128, 128
      %17 = vsyncadd [#allocation4], %s16
      %s19 = sshll.u32 [#allocation3], 4
      %s20 = int_to_ptr.vmem [resolvable:$true] %s19
      %22 = dma.hbm_to_vmem [thread:$0]  %s0, 128, %s20, [#allocation4]
    $region5: #{tpu_custom_call.1} parent=1 // pred_fallthru
      _
    // Predicated region
    $region6: #{tpu_custom_call.1} parent=1 // pred_check
      _
    $region7: #{tpu_custom_call.1} parent=1 // pred_check_branch
      %24 = sbr.rel (0) target = $region9
    $region8: #{tpu_custom_call.1} parent=1 // pred_region
      %s26 = ssub.s32 2048, 2048
      %27 = vsyncadd [#allocation7], %s26
      %s28 = sshll.u32 [#allocation6], 4
      %s29 = int_to_ptr.vmem [resolvable:$true] %s28
      %34 = dma.hbm_to_vmem [thread:$0]  %s1, 2048, %s29, [#allocation7], 128, 128, 8
    $region9: #{tpu_custom_call.1} parent=1 // pred_fallthru
      _
    // Predicated region
    $region10: #{tpu_custom_call.1} parent=1 // pred_check
      _
    $region11: #{tpu_custom_call.1} parent=1 // pred_check_branch
      %36 = sbr.rel (0) target = $region13
    $region12: #{tpu_custom_call.1} parent=1 // pred_region
      %s38 = ssub.s32 2048, 2048
      %39 = vsyncadd [#allocation7], %s38
      %s40 = sshll.u32 [#allocation8], 4
      %s41 = int_to_ptr.vmem [resolvable:$true] %s40
      %46 = dma.hbm_to_vmem [thread:$0]  %s2, 2048, %s41, [#allocation7], 128, 128, 8
    $region13: #{tpu_custom_call.1} parent=1 // pred_fallthru
      _
    // Predicated region
    $region14: #{tpu_custom_call.1} parent=1 // pred_check
      _
    $region15: #{tpu_custom_call.1} parent=1 // pred_check_branch
      %48 = sbr.rel (0) target = $region17
    $region16: #{tpu_custom_call.1} parent=1 // pred_region
      %s50 = ssub.s32 2048, 2048
      %51 = vsyncadd [#allocation10], %s50
      %s52 = sshll.u32 [#allocation9], 4
      %s53 = int_to_ptr.vmem [resolvable:$true] %s52
      %58 = dma.hbm_to_vmem [thread:$0]  %s3, 2048, %s53, [#allocation10], 128, 128, 8
    $region17: #{tpu_custom_call.1} parent=1 // pred_fallthru
      _
    // Predicated region
    $region18: #{tpu_custom_call.1} parent=1 // pred_check
      _
    $region19: #{tpu_custom_call.1} parent=1 // pred_check_branch
      %60 = sbr.rel (0) target = $region21
    $region20: #{tpu_custom_call.1} parent=1 // pred_region
      %61 = dma.done [#allocation4], 128
    $region21: #{tpu_custom_call.1} parent=1 // pred_fallthru
      _
    // Predicated region
    $region22: #{tpu_custom_call.1} parent=1 // pred_check
      _
    $region23: #{tpu_custom_call.1} parent=1 // pred_check_branch
      %63 = sbr.rel (0) target = $region25
    $region24: #{tpu_custom_call.1} parent=1 // pred_region
      %64 = dma.done [#allocation7], 2048
    $region25: #{tpu_custom_call.1} parent=1 // pred_fallthru
      _
    // Predicated region
    $region26: #{tpu_custom_call.1} parent=1 // pred_check
      _
    $region27: #{tpu_custom_call.1} parent=1 // pred_check_branch
      %66 = sbr.rel (0) target = $region29
    $region28: #{tpu_custom_call.1} parent=1 // pred_region
      %67 = dma.done [#allocation7], 2048
    $region29: #{tpu_custom_call.1} parent=1 // pred_fallthru
      _
    // Predicated region
    $region30: #{tpu_custom_call.1} parent=1 // pred_check
      _
    $region31: #{tpu_custom_call.1} parent=1 // pred_check_branch
      %69 = sbr.rel (0) target = $region33
    $region32: #{tpu_custom_call.1} parent=1 // pred_region
      %70 = dma.done [#allocation10], 2048
    $region33: #{tpu_custom_call.1} parent=1 // pred_fallthru
      _
    %p71 = scmp.eq.s32.totalorder 0, 0
    // Predicated region
    $region34: #{tpu_custom_call.1} parent=1 // pred_check
      %p72 = pneg %p71
    $region35: #{tpu_custom_call.1} parent=1 // pred_check_branch
      %74 = sbr.rel (%p72) target = $region37
    $region36: #{tpu_custom_call.1} parent=1 // pred_region
      %v75 = vld [vmem:[#allocation8] sm:$0xff]
      %v76 = vld [vmem:[#allocation8 + $0x8] sm:$0xff]
      %v77 = vld [vmem:[#allocation8 + $0x10] sm:$0xff]
      %v78 = vld [vmem:[#allocation8 + $0x18] sm:$0xff]
      %v79 = vld [vmem:[#allocation8 + $0x20] sm:$0xff]
      %v80 = vld [vmem:[#allocation8 + $0x28] sm:$0xff]
      %v81 = vld [vmem:[#allocation8 + $0x30] sm:$0xff]
      %v82 = vld [vmem:[#allocation8 + $0x38] sm:$0xff]
      %v83 = vld [vmem:[#allocation8 + $0x40] sm:$0xff]
      %v84 = vld [vmem:[#allocation8 + $0x48] sm:$0xff]
      %v85 = vld [vmem:[#allocation8 + $0x50] sm:$0xff]
      %v86 = vld [vmem:[#allocation8 + $0x58] sm:$0xff]
      %v87 = vld [vmem:[#allocation8 + $0x60] sm:$0xff]
      %v88 = vld [vmem:[#allocation8 + $0x68] sm:$0xff]
      %v89 = vld [vmem:[#allocation8 + $0x70] sm:$0xff]
      %v90 = vld [vmem:[#allocation8 + $0x78] sm:$0xff]
      %v91 = vmax.f32 %v75, 0.0
      %v92 = vmax.f32 %v76, 0.0
      %v93 = vmax.f32 %v77, 0.0
      %v94 = vmax.f32 %v78, 0.0
      %v95 = vmax.f32 %v79, 0.0
      %v96 = vmax.f32 %v80, 0.0
      %v97 = vmax.f32 %v81, 0.0
      %v98 = vmax.f32 %v82, 0.0
      %v99 = vmax.f32 %v83, 0.0
      %v100 = vmax.f32 %v84, 0.0
      %v101 = vmax.f32 %v85, 0.0
      %v102 = vmax.f32 %v86, 0.0
      %v103 = vmax.f32 %v87, 0.0
      %v104 = vmax.f32 %v88, 0.0
      %v105 = vmax.f32 %v89, 0.0
      %v106 = vmax.f32 %v90, 0.0
      %v107 = vand.u32 2147483647, %v75
      %v108 = vand.u32 2147483647, %v76
      %v109 = vand.u32 2147483647, %v77
      %v110 = vand.u32 2147483647, %v78
      %v111 = vand.u32 2147483647, %v79
      %v112 = vand.u32 2147483647, %v80
      %v113 = vand.u32 2147483647, %v81
      %v114 = vand.u32 2147483647, %v82
      %v115 = vand.u32 2147483647, %v83
      %v116 = vand.u32 2147483647, %v84
      %v117 = vand.u32 2147483647, %v85
      %v118 = vand.u32 2147483647, %v86
      %v119 = vand.u32 2147483647, %v87
      %v120 = vand.u32 2147483647, %v88
      %v121 = vand.u32 2147483647, %v89
      %v122 = vand.u32 2147483647, %v90
      %v123 = vsub.f32 0.0, %v107
      %v124 = vsub.f32 0.0, %v108
      %v125 = vsub.f32 0.0, %v109
      %v126 = vsub.f32 0.0, %v110
      %v127 = vsub.f32 0.0, %v111
      %v128 = vsub.f32 0.0, %v112
      %v129 = vsub.f32 0.0, %v113
      %v130 = vsub.f32 0.0, %v114
      %v131 = vsub.f32 0.0, %v115
      %v132 = vsub.f32 0.0, %v116
      %v133 = vsub.f32 0.0, %v117
      %v134 = vsub.f32 0.0, %v118
      %v135 = vsub.f32 0.0, %v119
      %v136 = vsub.f32 0.0, %v120
      %v137 = vsub.f32 0.0, %v121
      %v138 = vsub.f32 0.0, %v122
      %v139 = vmul.f32 %v123, 1.442695
      %v140 = vpow.pop %v139
      %v141 = vmul.f32 %v124, 1.442695
      %v142 = vpow.pop %v141
      %v143 = vmul.f32 %v125, 1.442695
      %v144 = vpow.pop %v143
      %v145 = vmul.f32 %v126, 1.442695
      %v146 = vpow.pop %v145
      %v147 = vmul.f32 %v127, 1.442695
      %v148 = vpow.pop %v147
      %v149 = vmul.f32 %v128, 1.442695
      %v150 = vpow.pop %v149
      %v151 = vmul.f32 %v129, 1.442695
      %v152 = vpow.pop %v151
      %v153 = vmul.f32 %v130, 1.442695
      %v154 = vpow.pop %v153
      %v155 = vmul.f32 %v131, 1.442695
      %v156 = vpow.pop %v155
      %v157 = vmul.f32 %v132, 1.442695
      %v158 = vpow.pop %v157
      %v159 = vmul.f32 %v133, 1.442695
      %v160 = vpow.pop %v159
      %v161 = vmul.f32 %v134, 1.442695
      %v162 = vpow.pop %v161
      %v163 = vmul.f32 %v135, 1.442695
      %v164 = vpow.pop %v163
      %v165 = vmul.f32 %v136, 1.442695
      %v166 = vpow.pop %v165
      %v167 = vmul.f32 %v137, 1.442695
      %v168 = vpow.pop %v167
      %v169 = vmul.f32 %v138, 1.442695
      %v170 = vpow.pop %v169
      %v171 = vadd.f32 %v140, 1.0
      %v172 = vadd.f32 %v142, 1.0
      %v173 = vadd.f32 %v144, 1.0
      %v174 = vadd.f32 %v146, 1.0
      %v175 = vadd.f32 %v148, 1.0
      %v176 = vadd.f32 %v150, 1.0
      %v177 = vadd.f32 %v152, 1.0
      %v178 = vadd.f32 %v154, 1.0
      %v179 = vadd.f32 %v156, 1.0
      %v180 = vadd.f32 %v158, 1.0
      %v181 = vadd.f32 %v160, 1.0
      %v182 = vadd.f32 %v162, 1.0
      %v183 = vadd.f32 %v164, 1.0
      %v184 = vadd.f32 %v166, 1.0
      %v185 = vadd.f32 %v168, 1.0
      %v186 = vadd.f32 %v170, 1.0
      %v187 = vlog2.pop %v171
      %v188 = vmul.f32 %v187, 0.6931472
      %v189 = vlog2.pop %v172
      %v190 = vmul.f32 %v189, 0.6931472
      %v191 = vlog2.pop %v173
      %v192 = vmul.f32 %v191, 0.6931472
      %v193 = vlog2.pop %v174
      %v194 = vmul.f32 %v193, 0.6931472
      %v195 = vlog2.pop %v175
      %v196 = vmul.f32 %v195, 0.6931472
      %v197 = vlog2.pop %v176
      %v198 = vmul.f32 %v197, 0.6931472
      %v199 = vlog2.pop %v177
      %v200 = vmul.f32 %v199, 0.6931472
      %v201 = vlog2.pop %v178
      %v202 = vmul.f32 %v201, 0.6931472
      %v203 = vlog2.pop %v179
      %v204 = vmul.f32 %v203, 0.6931472
      %v205 = vlog2.pop %v180
      %v206 = vmul.f32 %v205, 0.6931472
      %v207 = vlog2.pop %v181
      %v208 = vmul.f32 %v207, 0.6931472
      %v209 = vlog2.pop %v182
      %v210 = vmul.f32 %v209, 0.6931472
      %v211 = vlog2.pop %v183
      %v212 = vmul.f32 %v211, 0.6931472
      %v213 = vlog2.pop %v184
      %v214 = vmul.f32 %v213, 0.6931472
      %v215 = vlog2.pop %v185
      %v216 = vmul.f32 %v215, 0.6931472
      %v217 = vlog2.pop %v186
      %v218 = vmul.f32 %v217, 0.6931472
      %v219 = vadd.f32 %v91, %v188
      %v220 = vadd.f32 %v92, %v190
      %v221 = vadd.f32 %v93, %v192
      %v222 = vadd.f32 %v94, %v194
      %v223 = vadd.f32 %v95, %v196
      %v224 = vadd.f32 %v96, %v198
      %v225 = vadd.f32 %v97, %v200
      %v226 = vadd.f32 %v98, %v202
      %v227 = vadd.f32 %v99, %v204
      %v228 = vadd.f32 %v100, %v206
      %v229 = vadd.f32 %v101, %v208
      %v230 = vadd.f32 %v102, %v210
      %v231 = vadd.f32 %v103, %v212
      %v232 = vadd.f32 %v104, %v214
      %v233 = vadd.f32 %v105, %v216
      %v234 = vadd.f32 %v106, %v218
      %v235 = vld [vmem:[#allocation6] sm:$0xff]
      %v236 = vld [vmem:[#allocation6 + $0x8] sm:$0xff]
      %v237 = vld [vmem:[#allocation6 + $0x10] sm:$0xff]
      %v238 = vld [vmem:[#allocation6 + $0x18] sm:$0xff]
      %v239 = vld [vmem:[#allocation6 + $0x20] sm:$0xff]
      %v240 = vld [vmem:[#allocation6 + $0x28] sm:$0xff]
      %v241 = vld [vmem:[#allocation6 + $0x30] sm:$0xff]
      %v242 = vld [vmem:[#allocation6 + $0x38] sm:$0xff]
      %v243 = vld [vmem:[#allocation6 + $0x40] sm:$0xff]
      %v244 = vld [vmem:[#allocation6 + $0x48] sm:$0xff]
      %v245 = vld [vmem:[#allocation6 + $0x50] sm:$0xff]
      %v246 = vld [vmem:[#allocation6 + $0x58] sm:$0xff]
      %v247 = vld [vmem:[#allocation6 + $0x60] sm:$0xff]
      %v248 = vld [vmem:[#allocation6 + $0x68] sm:$0xff]
      %v249 = vld [vmem:[#allocation6 + $0x70] sm:$0xff]
      %v250 = vld [vmem:[#allocation6 + $0x78] sm:$0xff]
      %v251 = vld [vmem:[#allocation9] sm:$0xff]
      %v252 = vld [vmem:[#allocation9 + $0x8] sm:$0xff]
      %v253 = vld [vmem:[#allocation9 + $0x10] sm:$0xff]
      %v254 = vld [vmem:[#allocation9 + $0x18] sm:$0xff]
      %v255 = vld [vmem:[#allocation9 + $0x20] sm:$0xff]
      %v256 = vld [vmem:[#allocation9 + $0x28] sm:$0xff]
      %v257 = vld [vmem:[#allocation9 + $0x30] sm:$0xff]
      %v258 = vld [vmem:[#allocation9 + $0x38] sm:$0xff]
      %v259 = vld [vmem:[#allocation9 + $0x40] sm:$0xff]
      %v260 = vld [vmem:[#allocation9 + $0x48] sm:$0xff]
      %v261 = vld [vmem:[#allocation9 + $0x50] sm:$0xff]
      %v262 = vld [vmem:[#allocation9 + $0x58] sm:$0xff]
      %v263 = vld [vmem:[#allocation9 + $0x60] sm:$0xff]
      %v264 = vld [vmem:[#allocation9 + $0x68] sm:$0xff]
      %v265 = vld [vmem:[#allocation9 + $0x70] sm:$0xff]
      %v266 = vld [vmem:[#allocation9 + $0x78] sm:$0xff]
      %v267 = vmul.f32 %v251, %v219
      %v268 = vmul.f32 %v252, %v220
      %v269 = vmul.f32 %v253, %v221
      %v270 = vmul.f32 %v254, %v222
      %v271 = vmul.f32 %v255, %v223
      %v272 = vmul.f32 %v256, %v224
      %v273 = vmul.f32 %v257, %v225
      %v274 = vmul.f32 %v258, %v226
      %v275 = vmul.f32 %v259, %v227
      %v276 = vmul.f32 %v260, %v228
      %v277 = vmul.f32 %v261, %v229
      %v278 = vmul.f32 %v262, %v230
      %v279 = vmul.f32 %v263, %v231
      %v280 = vmul.f32 %v264, %v232
      %v281 = vmul.f32 %v265, %v233
      %v282 = vmul.f32 %v266, %v234
      %v283 = vadd.f32 %v235, %v267
      %v284 = vadd.f32 %v236, %v268
      %v285 = vadd.f32 %v237, %v269
      %v286 = vadd.f32 %v238, %v270
      %v287 = vadd.f32 %v239, %v271
      %v288 = vadd.f32 %v240, %v272
      %v289 = vadd.f32 %v241, %v273
      %v290 = vadd.f32 %v242, %v274
      %v291 = vadd.f32 %v243, %v275
      %v292 = vadd.f32 %v244, %v276
      %v293 = vadd.f32 %v245, %v277
      %v294 = vadd.f32 %v246, %v278
      %v295 = vadd.f32 %v247, %v279
      %v296 = vadd.f32 %v248, %v280
      %v297 = vadd.f32 %v249, %v281
      %v298 = vadd.f32 %v250, %v282
      %299 = vst [vmem:[#allocation2] sm:$0xff] %v283
      %300 = vst [vmem:[#allocation2 + $0x8] sm:$0xff] %v284
      %301 = vst [vmem:[#allocation2 + $0x10] sm:$0xff] %v285
      %302 = vst [vmem:[#allocation2 + $0x18] sm:$0xff] %v286
      %303 = vst [vmem:[#allocation2 + $0x20] sm:$0xff] %v287
      %304 = vst [vmem:[#allocation2 + $0x28] sm:$0xff] %v288
      %305 = vst [vmem:[#allocation2 + $0x30] sm:$0xff] %v289
      %306 = vst [vmem:[#allocation2 + $0x38] sm:$0xff] %v290
      %307 = vst [vmem:[#allocation2 + $0x40] sm:$0xff] %v291
      %308 = vst [vmem:[#allocation2 + $0x48] sm:$0xff] %v292
      %309 = vst [vmem:[#allocation2 + $0x50] sm:$0xff] %v293
      %310 = vst [vmem:[#allocation2 + $0x58] sm:$0xff] %v294
      %311 = vst [vmem:[#allocation2 + $0x60] sm:$0xff] %v295
      %312 = vst [vmem:[#allocation2 + $0x68] sm:$0xff] %v296
      %313 = vst [vmem:[#allocation2 + $0x70] sm:$0xff] %v297
      %314 = vst [vmem:[#allocation2 + $0x78] sm:$0xff] %v298
    $region37: #{tpu_custom_call.1} parent=1 // pred_fallthru
      _
    %v315 = vld [vmem:[#allocation3] sm:$0xff]
    %v316 = vld [vmem:[#allocation2] sm:$0xff]
    %v317 = vld [vmem:[#allocation2 + $0x8] sm:$0xff]
    %v318 = vld [vmem:[#allocation2 + $0x10] sm:$0xff]
    %v319 = vld [vmem:[#allocation2 + $0x18] sm:$0xff]
    %v320 = vld [vmem:[#allocation2 + $0x20] sm:$0xff]
    %v321 = vld [vmem:[#allocation2 + $0x28] sm:$0xff]
    %v322 = vld [vmem:[#allocation2 + $0x30] sm:$0xff]
    %v323 = vld [vmem:[#allocation2 + $0x38] sm:$0xff]
    %v324 = vld [vmem:[#allocation2 + $0x40] sm:$0xff]
    %v325 = vld [vmem:[#allocation2 + $0x48] sm:$0xff]
    %v326 = vld [vmem:[#allocation2 + $0x50] sm:$0xff]
    %v327 = vld [vmem:[#allocation2 + $0x58] sm:$0xff]
    %v328 = vld [vmem:[#allocation2 + $0x60] sm:$0xff]
    %v329 = vld [vmem:[#allocation2 + $0x68] sm:$0xff]
    %v330 = vld [vmem:[#allocation2 + $0x70] sm:$0xff]
    %v331 = vld [vmem:[#allocation2 + $0x78] sm:$0xff]
    %332 = vmatprep.subr.mxu0 0.0
    %333 = vmatpush1.xpose.msra.mxu0 %v316
    %334 = vmatprep.subr.mxu0 0.0
    %335 = vmatpush1.xpose.msra.mxu0 %v317
    %336 = vmatprep.subr.mxu0 0.0
    %337 = vmatpush1.xpose.msra.mxu0 %v318
    %338 = vmatprep.subr.mxu0 0.0
    %339 = vmatpush1.xpose.msra.mxu0 %v319
    %340 = vmatprep.subr.mxu0 0.0
    %341 = vmatpush1.xpose.msra.mxu0 %v320
    %342 = vmatprep.subr.mxu0 0.0
    %343 = vmatpush1.xpose.msra.mxu0 %v321
    %344 = vmatprep.subr.mxu0 0.0
    %345 = vmatpush1.xpose.msra.mxu0 %v322
    %346 = vmatprep.subr.mxu0 0.0
    %347 = vmatpush1.xpose.msra.mxu0 %v323
    %348 = vmatprep.subr.mxu0 0.0
    %349 = vmatpush1.xpose.msra.mxu0 %v324
    %350 = vmatprep.subr.mxu0 0.0
    %351 = vmatpush1.xpose.msra.mxu0 %v325
    %352 = vmatprep.subr.mxu0 0.0
    %353 = vmatpush1.xpose.msra.mxu0 %v326
    %354 = vmatprep.subr.mxu0 0.0
    %355 = vmatpush1.xpose.msra.mxu0 %v327
    %356 = vmatprep.subr.mxu0 0.0
    %357 = vmatpush1.xpose.msra.mxu0 %v328
    %358 = vmatprep.subr.mxu0 0.0
    %359 = vmatpush1.xpose.msra.mxu0 %v329
    %360 = vmatprep.subr.mxu0 0.0
    %361 = vmatpush1.xpose.msra.mxu0 %v330
    %362 = vmatprep.subr.mxu0 0.0
    %363 = vmatpush1.xpose.msra.mxu0 %v331
    %364 = vmatprep.subr.mxu0 0.0
    %365 = vmatpush1.xpose.msra.mxu0 0.0
    %366 = vmatprep.subr.mxu0 0.0
    %367 = vmatpush1.xpose.msra.mxu0 0.0
    %368 = vmatprep.subr.mxu0 0.0
    %369 = vmatpush1.xpose.msra.mxu0 0.0
    %370 = vmatprep.subr.mxu0 0.0
    %371 = vmatpush1.xpose.msra.mxu0 0.0
    %372 = vmatprep.subr.mxu0 0.0
    %373 = vmatpush1.xpose.msra.mxu0 0.0
    %374 = vmatprep.subr.mxu0 0.0
    %375 = vmatpush1.xpose.msra.mxu0 0.0
    %376 = vmatprep.subr.mxu0 0.0
    %377 = vmatpush1.xpose.msra.mxu0 0.0
    %378 = vmatprep.subr.mxu0 0.0
    %379 = vmatpush1.xpose.msra.mxu0 0.0
    %380 = vmatprep.subr.mxu0 0.0
    %381 = vmatpush1.xpose.msra.mxu0 0.0
    %382 = vmatprep.subr.mxu0 0.0
    %383 = vmatpush1.xpose.msra.mxu0 0.0
    %384 = vmatprep.subr.mxu0 0.0
    %385 = vmatpush1.xpose.msra.mxu0 0.0
    %386 = vmatprep.subr.mxu0 0.0
    %387 = vmatpush1.xpose.msra.mxu0 0.0
    %388 = vmatprep.subr.mxu0 0.0
    %389 = vmatpush1.xpose.msra.mxu0 0.0
    %390 = vmatprep.subr.mxu0 0.0
    %391 = vmatpush1.xpose.msra.mxu0 0.0
    %392 = vmatprep.subr.mxu0 0.0
    %393 = vmatpush1.xpose.msra.mxu0 0.0
    %394 = vmatprep.subr.mxu0 0.0
    %395 = vmatpush1.xpose.msra.mxu0 0.0
    %396 = vmatprep.mubr.f32.mxu0 0.0
    %397 = vmatmul.mubr.f32.gmra.mrb[0].mxu0 %v315
    %v398 = vpop.f32.mrb[0].mxu0
    %v399 = vadd.f32 0.0, %v398
    %v400 = vpop.f32.mrb[0].mxu0
    %401 = vdwg.mxu0
    %402 = vst [vmem:[#allocation11] sm:$0xff] %v399
    // Predicated region
    $region38: #{tpu_custom_call.1} parent=1 // pred_check
      _
    $region39: #{tpu_custom_call.1} parent=1 // pred_check_branch
      %404 = sbr.rel (0) target = $region41
    $region40: #{tpu_custom_call.1} parent=1 // pred_region
      %s406 = ssub.s32 128, 128
      %407 = vsyncadd [#allocation5], %s406
      %s409 = sshll.u32 [#allocation11], 4
      %s410 = int_to_ptr.vmem [resolvable:$true] %s409
      %412 = dma.vmem_to_hbm [thread:$0]  %s410, 128, %s4, [#allocation5]
    $region41: #{tpu_custom_call.1} parent=1 // pred_fallthru
      _
    // Predicated region
    $region42: #{tpu_custom_call.1} parent=1 // pred_check
      _
    $region43: #{tpu_custom_call.1} parent=1 // pred_check_branch
      %414 = sbr.rel (0) target = $region45
    $region44: #{tpu_custom_call.1} parent=1 // pred_region
      %415 = dma.done [#allocation5], 128
    $region45: #{tpu_custom_call.1} parent=1 // pred_fallthru
      _
    %416 = vsyncpa [#allocation4], 1
    %417 = vsyncpa [#allocation7], 1
    %418 = vsyncpa [#allocation10], 1
    %419 = vsyncpa [#allocation5], 1

</llo_original>
